<compile_context>
chip_gen: v6e
topology: v6e:2x2x1
jax: 0.10.0
libtpu: 0.0.40
codegen_flags: <defaults>
</compile_context>

<pallas_src>
import functools

import jax
import jax.numpy as jnp
from jax.experimental import pallas as pl
from jax.experimental.pallas import tpu as pltpu

_LANE = 128


def _laplacian_loss_kernel(pred_ref, gt_ref, conf_ref, psum_ref, pcnt_ref,
                           *, a, b, max_gtnorm, num_channels):
    f32 = jnp.float32

    # Channel 0 drives the finiteness mask (faithful to the PyTorch reference).
    gt0 = gt_ref[0, 0].astype(f32)                      # (RT, 128)
    pred0 = pred_ref[0, 0].astype(f32)
    mask = jnp.isfinite(gt0)

    l1 = jnp.abs(gt0 - pred0)                           # (RT, 128)

    if max_gtnorm is not None:
        if num_channels == 1:
            # _get_gtnorm returns gt itself when C == 1.
            mask = jnp.logical_and(mask, gt0 < f32(max_gtnorm))
        else:
            nsq = gt0 * gt0

    # Unrolled channel loop: pure elementwise VPU adds (channels live on a
    # leading axis, so no XLU cross-sublane reduction per pixel).
    for c in range(1, num_channels):
        gtc = gt_ref[0, c].astype(f32)
        l1 = l1 + jnp.abs(gtc - pred_ref[0, c].astype(f32))
        if max_gtnorm is not None:
            nsq = nsq + gtc * gtc

    if max_gtnorm is not None and num_channels > 1:
        # sqrt(sum sq) < max  <=>  sum sq < max^2  (both sides non-negative).
        mask = jnp.logical_and(mask, nsq < f32(max_gtnorm) * f32(max_gtnorm))

    conf_raw = conf_ref[0].astype(f32)                  # (RT, 128)
    conf_t = (f32(b) - f32(a)) * jax.nn.sigmoid(conf_raw) + f32(a)
    term = l1 / conf_t + jnp.log(conf_t)                # (RT, 128)

    # NOTE: must keep the select (not mask * term): term is NaN wherever gt is
    # non-finite, and 0 * NaN == NaN.
    masked = jnp.where(mask, term, f32(0.0))

    # One cross-sublane reduce per block (amortized over RT*128*C elements);
    # lane-dense (1, 128) partials go out, final reduction happens in JAX.
    psum_ref[0, 0] = jnp.sum(masked, axis=0, keepdims=True)
    pcnt_ref[0, 0] = jnp.sum(mask.astype(f32), axis=0, keepdims=True)


def laplacian_loss_bounded(predictions, gt, conf, *,
                           max_gtnorm=10000.0, a=0.25, b=4.0,
                           rows_per_tile=64):
    """Pallas TPU implementation of LaplacianLossBounded.forward (mean loss)."""
    B, C, H, W = gt.shape
    N = H * W

    nr_raw = -(-N // _LANE)                 # lane-rows of 128
    rt = min(rows_per_tile, nr_raw)         # sublane rows per tile
    nb = -(-nr_raw // rt)                   # number of N-tiles per image
    nr = nb * rt                            # padded lane-row count
    n_pad = nr * _LANE

    def _pack(x, c, fill):
        x = x.reshape(B, c, N)
        if n_pad != N:
            pad = jnp.full((B, c, n_pad - N), fill, dtype=x.dtype)
            x = jnp.concatenate([x, pad], axis=-1)
        return x.reshape(B, c, nr, _LANE)

    # No f32 cast in the wrapper: stream native dtype, upcast in-kernel.
    pred4 = _pack(predictions, C, 0)
    gt4 = _pack(gt, C, jnp.nan)             # NaN padding -> masked out
    conf3 = _pack(conf, 1, 0).reshape(B, nr, _LANE)

    kernel = functools.partial(
        _laplacian_loss_kernel, a=a, b=b, max_gtnorm=max_gtnorm,
        num_channels=C)

    psum, pcnt = pl.pallas_call(
        kernel,
        out_shape=(jax.ShapeDtypeStruct((B, nb, 1, _LANE), jnp.float32),
                   jax.ShapeDtypeStruct((B, nb, 1, _LANE), jnp.float32)),
        grid_spec=pltpu.PrefetchScalarGridSpec(
            num_scalar_prefetch=0,
            grid=(B, nb),
            in_specs=[
                pl.BlockSpec((1, C, rt, _LANE), lambda i, j: (i, 0, j, 0)),
                pl.BlockSpec((1, C, rt, _LANE), lambda i, j: (i, 0, j, 0)),
                pl.BlockSpec((1, rt, _LANE), lambda i, j: (i, j, 0)),
            ],
            out_specs=[
                pl.BlockSpec((1, 1, 1, _LANE), lambda i, j: (i, j, 0, 0)),
                pl.BlockSpec((1, 1, 1, _LANE), lambda i, j: (i, j, 0, 0)),
            ],
        ),
        compiler_params=pltpu.CompilerParams(
            dimension_semantics=("parallel", "parallel")),
    )(pred4, gt4, conf3)

    # Tiny final reduction + divide in plain JAX.
    return jnp.sum(psum) / jnp.sum(pcnt)


def _reference(predictions, gt, conf, *, max_gtnorm=10000.0, a=0.25, b=4.0):
    """Plain-JAX reference matching the PyTorch forward."""
    mask = jnp.isfinite(gt)[:, 0, :, :]
    if gt.shape[1] == 1:
        gtnorm = gt
    else:
        gtnorm = jnp.sqrt(jnp.sum(gt ** 2, axis=1, keepdims=True))
    if max_gtnorm is not None:
        mask = mask & (gtnorm[:, 0, :, :] < max_gtnorm)
    c = (b - a) * jax.nn.sigmoid(conf[:, 0, :, :]) + a
    term = jnp.abs(gt - predictions).sum(axis=1) / c + jnp.log(c)
    return jnp.sum(jnp.where(mask, term, 0.0)) / jnp.sum(mask)


if __name__ == "__main__":
    MAX_GTNORM, A, B_ = 10000.0, 0.25, 4.0

    key = jax.random.PRNGKey(0)
    k1, k2, k3 = jax.random.split(key, 3)

    # Main check: small NCHW shapes, NaN/Inf injected to exercise the mask.
    Bsz, C, H, W = 2, 4, 16, 16
    predictions = jax.random.normal(k1, (Bsz, C, H, W), dtype=jnp.float32)
    gt = 3.0 * jax.random.normal(k2, (Bsz, C, H, W), dtype=jnp.float32)
    conf = jax.random.normal(k3, (Bsz, 1, H, W), dtype=jnp.float32)
    gt = gt.at[0, 1, 3, 5].set(jnp.nan).at[1, 0, 2, 2].set(jnp.inf)

    loss = laplacian_loss_bounded(predictions, gt, conf,
                                  max_gtnorm=MAX_GTNORM, a=A, b=B_)
    loss = jax.block_until_ready(loss)
    ref = _reference(predictions, gt, conf, max_gtnorm=MAX_GTNORM, a=A, b=B_)
    assert jnp.isfinite(loss), "kernel produced non-finite loss"
    assert jnp.allclose(loss, ref, rtol=1e-5, atol=1e-5), (loss, ref)

    # Second check: spatial size that is NOT a multiple of 128 (exercises the
    # NaN-padding path) and a single-channel gt (exercises the C==1 norm path).
    k4, k5, k6 = jax.random.split(jax.random.PRNGKey(1), 3)
    Bsz2, C2, H2, W2 = 2, 1, 20, 20
    pred2 = jax.random.normal(k4, (Bsz2, C2, H2, W2), dtype=jnp.float32)
    gt2 = 2.0 * jax.random.normal(k5, (Bsz2, C2, H2, W2), dtype=jnp.float32)
    conf2 = jax.random.normal(k6, (Bsz2, 1, H2, W2), dtype=jnp.float32)
    gt2 = gt2.at[1, 0, 5, 7].set(jnp.nan)

    loss2 = laplacian_loss_bounded(pred2, gt2, conf2,
                                   max_gtnorm=MAX_GTNORM, a=A, b=B_)
    loss2 = jax.block_until_ready(loss2)
    ref2 = _reference(pred2, gt2, conf2, max_gtnorm=MAX_GTNORM, a=A, b=B_)
    assert jnp.isfinite(loss2), "kernel produced non-finite loss (padded case)"
    assert jnp.allclose(loss2, ref2, rtol=1e-5, atol=1e-5), (loss2, ref2)

    print("KERNEL_OK")
</pallas_src>

<mosaic_0001>
module attributes {stable_mosaic.version = 11 : i64} {
  func.func @_laplacian_loss_kernel(%arg0: i32, %arg1: i32, %arg2: memref<1x4x2x128xf32, #tpu.memory_space<vmem>>, %arg3: memref<1x4x2x128xf32, #tpu.memory_space<vmem>>, %arg4: memref<1x2x128xf32, #tpu.memory_space<vmem>>, %arg5: memref<1x1x1x128xf32, #tpu.memory_space<vmem>>, %arg6: memref<1x1x1x128xf32, #tpu.memory_space<vmem>>) attributes {dimension_semantics = [#tpu.dimension_semantics<parallel>, #tpu.dimension_semantics<parallel>], iteration_bounds = array<i64: 2, 1>, scalar_prefetch = 0 : i64, scratch_operands = 0 : i64, tpu.core_type = #tpu.core_type<tc>, window_params = [{transform_indices = @transform_0, window_bounds = array<i64: 1, 4, 2, 128>}, {transform_indices = @transform_1, window_bounds = array<i64: 1, 4, 2, 128>}, {transform_indices = @transform_2, window_bounds = array<i64: 1, 2, 128>}, {transform_indices = @transform_3, window_bounds = array<i64: 1, 1, 1, 128>}, {transform_indices = @transform_4, window_bounds = array<i64: 1, 1, 1, 128>}]} {
    %c0 = arith.constant 0 : index
    %c0_0 = arith.constant 0 : index
    %c0_1 = arith.constant 0 : index
    %c0_2 = arith.constant 0 : index
    %0 = vector.load %arg3[%c0, %c0_0, %c0_1, %c0_2] : memref<1x4x2x128xf32, #tpu.memory_space<vmem>>, vector<1x1x2x128xf32>
    %1 = vector.shape_cast %0 : vector<1x1x2x128xf32> to vector<2x128xf32>
    %c0_3 = arith.constant 0 : index
    %c0_4 = arith.constant 0 : index
    %c0_5 = arith.constant 0 : index
    %c0_6 = arith.constant 0 : index
    %2 = vector.load %arg2[%c0_3, %c0_4, %c0_5, %c0_6] : memref<1x4x2x128xf32, #tpu.memory_space<vmem>>, vector<1x1x2x128xf32>
    %3 = vector.shape_cast %2 : vector<1x1x2x128xf32> to vector<2x128xf32>
    %4 = tpu.weird %1 : vector<2x128xf32> -> vector<2x128xi1>
    %cst = arith.constant dense<true> : vector<2x128xi1>
    %5 = arith.xori %4, %cst : vector<2x128xi1>
    %6 = arith.subf %1, %3 : vector<2x128xf32>
    %7 = math.absf %6 : vector<2x128xf32>
    %8 = arith.mulf %1, %1 : vector<2x128xf32>
    %c0_7 = arith.constant 0 : index
    %c1 = arith.constant 1 : index
    %c0_8 = arith.constant 0 : index
    %c0_9 = arith.constant 0 : index
    %9 = vector.load %arg3[%c0_7, %c1, %c0_8, %c0_9] : memref<1x4x2x128xf32, #tpu.memory_space<vmem>>, vector<1x1x2x128xf32>
    %10 = vector.shape_cast %9 : vector<1x1x2x128xf32> to vector<2x128xf32>
    %c0_10 = arith.constant 0 : index
    %c1_11 = arith.constant 1 : index
    %c0_12 = arith.constant 0 : index
    %c0_13 = arith.constant 0 : index
    %11 = vector.load %arg2[%c0_10, %c1_11, %c0_12, %c0_13] : memref<1x4x2x128xf32, #tpu.memory_space<vmem>>, vector<1x1x2x128xf32>
    %12 = vector.shape_cast %11 : vector<1x1x2x128xf32> to vector<2x128xf32>
    %13 = arith.subf %10, %12 : vector<2x128xf32>
    %14 = math.absf %13 : vector<2x128xf32>
    %15 = arith.addf %7, %14 : vector<2x128xf32>
    %16 = arith.mulf %10, %10 : vector<2x128xf32>
    %17 = arith.addf %8, %16 : vector<2x128xf32>
    %c0_14 = arith.constant 0 : index
    %c2 = arith.constant 2 : index
    %c0_15 = arith.constant 0 : index
    %c0_16 = arith.constant 0 : index
    %18 = vector.load %arg3[%c0_14, %c2, %c0_15, %c0_16] : memref<1x4x2x128xf32, #tpu.memory_space<vmem>>, vector<1x1x2x128xf32>
    %19 = vector.shape_cast %18 : vector<1x1x2x128xf32> to vector<2x128xf32>
    %c0_17 = arith.constant 0 : index
    %c2_18 = arith.constant 2 : index
    %c0_19 = arith.constant 0 : index
    %c0_20 = arith.constant 0 : index
    %20 = vector.load %arg2[%c0_17, %c2_18, %c0_19, %c0_20] : memref<1x4x2x128xf32, #tpu.memory_space<vmem>>, vector<1x1x2x128xf32>
    %21 = vector.shape_cast %20 : vector<1x1x2x128xf32> to vector<2x128xf32>
    %22 = arith.subf %19, %21 : vector<2x128xf32>
    %23 = math.absf %22 : vector<2x128xf32>
    %24 = arith.addf %15, %23 : vector<2x128xf32>
    %25 = arith.mulf %19, %19 : vector<2x128xf32>
    %26 = arith.addf %17, %25 : vector<2x128xf32>
    %c0_21 = arith.constant 0 : index
    %c3 = arith.constant 3 : index
    %c0_22 = arith.constant 0 : index
    %c0_23 = arith.constant 0 : index
    %27 = vector.load %arg3[%c0_21, %c3, %c0_22, %c0_23] : memref<1x4x2x128xf32, #tpu.memory_space<vmem>>, vector<1x1x2x128xf32>
    %28 = vector.shape_cast %27 : vector<1x1x2x128xf32> to vector<2x128xf32>
    %c0_24 = arith.constant 0 : index
    %c3_25 = arith.constant 3 : index
    %c0_26 = arith.constant 0 : index
    %c0_27 = arith.constant 0 : index
    %29 = vector.load %arg2[%c0_24, %c3_25, %c0_26, %c0_27] : memref<1x4x2x128xf32, #tpu.memory_space<vmem>>, vector<1x1x2x128xf32>
    %30 = vector.shape_cast %29 : vector<1x1x2x128xf32> to vector<2x128xf32>
    %31 = arith.subf %28, %30 : vector<2x128xf32>
    %32 = math.absf %31 : vector<2x128xf32>
    %33 = arith.addf %24, %32 : vector<2x128xf32>
    %34 = arith.mulf %28, %28 : vector<2x128xf32>
    %35 = arith.addf %26, %34 : vector<2x128xf32>
    %cst_28 = arith.constant 1.000000e+04 : f32
    %cst_29 = arith.constant 1.000000e+04 : f32
    %36 = arith.mulf %cst_28, %cst_29 : f32
    %37 = vector.broadcast %36 : f32 to vector<2x128xf32>
    %38 = arith.cmpf olt, %35, %37 : vector<2x128xf32>
    %39 = arith.andi %5, %38 : vector<2x128xi1>
    %c0_30 = arith.constant 0 : index
    %c0_31 = arith.constant 0 : index
    %c0_32 = arith.constant 0 : index
    %40 = vector.load %arg4[%c0_30, %c0_31, %c0_32] : memref<1x2x128xf32, #tpu.memory_space<vmem>>, vector<1x2x128xf32>
    %41 = vector.shape_cast %40 : vector<1x2x128xf32> to vector<2x128xf32>
    %cst_33 = arith.constant 4.000000e+00 : f32
    %cst_34 = arith.constant 2.500000e-01 : f32
    %42 = arith.subf %cst_33, %cst_34 : f32
    %43 = arith.negf %41 : vector<2x128xf32>
    %44 = math.exp %43 : vector<2x128xf32>
    %cst_35 = arith.constant 1.000000e+00 : f32
    %45 = vector.broadcast %cst_35 : f32 to vector<2x128xf32>
    %46 = arith.addf %45, %44 : vector<2x128xf32>
    %47 = arith.divf %45, %46 : vector<2x128xf32>
    %48 = vector.broadcast %42 : f32 to vector<2x128xf32>
    %49 = arith.mulf %48, %47 : vector<2x128xf32>
    %cst_36 = arith.constant 2.500000e-01 : f32
    %50 = vector.broadcast %cst_36 : f32 to vector<2x128xf32>
    %51 = arith.addf %49, %50 : vector<2x128xf32>
    %52 = arith.divf %33, %51 : vector<2x128xf32>
    %53 = math.log %51 : vector<2x128xf32>
    %54 = arith.addf %52, %53 : vector<2x128xf32>
    %cst_37 = arith.constant 0.000000e+00 : f32
    %55 = vector.broadcast %cst_37 : f32 to vector<2x128xf32>
    %56 = arith.select %39, %54, %55 : vector<2x128xi1>, vector<2x128xf32>
    %cst_38 = arith.constant dense<0.000000e+00> : vector<128xf32>
    %57 = vector.multi_reduction <add>, %56, %cst_38 [0] : vector<2x128xf32> to vector<128xf32>
    %58 = vector.shape_cast %57 : vector<128xf32> to vector<1x128xf32>
    %c0_39 = arith.constant 0 : index
    %c0_40 = arith.constant 0 : index
    %c0_41 = arith.constant 0 : index
    %c0_42 = arith.constant 0 : index
    %59 = vector.load %arg5[%c0_39, %c0_40, %c0_41, %c0_42] : memref<1x1x1x128xf32, #tpu.memory_space<vmem>>, vector<1x1x1x128xf32>
    %60 = vector.shape_cast %59 : vector<1x1x1x128xf32> to vector<1x128xf32>
    %61 = vector.shape_cast %58 : vector<1x128xf32> to vector<1x1x1x128xf32>
    tpu.vector_store %arg5[%c0_39, %c0_40, %c0_41, %c0_42], %61 {strides = array<i32>} : memref<1x1x1x128xf32, #tpu.memory_space<vmem>>, vector<1x1x1x128xf32>,
    %62 = arith.extui %39 : vector<2x128xi1> to vector<2x128xi32>
    %63 = arith.sitofp %62 : vector<2x128xi32> to vector<2x128xf32>
    %cst_43 = arith.constant dense<0.000000e+00> : vector<128xf32>
    %64 = vector.multi_reduction <add>, %63, %cst_43 [0] : vector<2x128xf32> to vector<128xf32>
    %65 = vector.shape_cast %64 : vector<128xf32> to vector<1x128xf32>
    %c0_44 = arith.constant 0 : index
    %c0_45 = arith.constant 0 : index
    %c0_46 = arith.constant 0 : index
    %c0_47 = arith.constant 0 : index
    %66 = vector.load %arg6[%c0_44, %c0_45, %c0_46, %c0_47] : memref<1x1x1x128xf32, #tpu.memory_space<vmem>>, vector<1x1x1x128xf32>
    %67 = vector.shape_cast %66 : vector<1x1x1x128xf32> to vector<1x128xf32>
    %68 = vector.shape_cast %65 : vector<1x128xf32> to vector<1x1x1x128xf32>
    tpu.vector_store %arg6[%c0_44, %c0_45, %c0_46, %c0_47], %68 {strides = array<i32>} : memref<1x1x1x128xf32, #tpu.memory_space<vmem>>, vector<1x1x1x128xf32>,
    return
  }
  func.func @transform_0(%arg0: i32, %arg1: i32) -> (i32, i32, i32, i32) {
    %c0_i32 = arith.constant 0 : i32
    %c0_i32_0 = arith.constant 0 : i32
    %c0_i32_1 = arith.constant 0 : i32
    return %arg0, %c0_i32, %arg1, %c0_i32_0 : i32, i32, i32, i32
  }
  func.func @transform_1(%arg0: i32, %arg1: i32) -> (i32, i32, i32, i32) {
    %c0_i32 = arith.constant 0 : i32
    %c0_i32_0 = arith.constant 0 : i32
    %c0_i32_1 = arith.constant 0 : i32
    return %arg0, %c0_i32, %arg1, %c0_i32_0 : i32, i32, i32, i32
  }
  func.func @transform_2(%arg0: i32, %arg1: i32) -> (i32, i32, i32) {
    %c0_i32 = arith.constant 0 : i32
    %c0_i32_0 = arith.constant 0 : i32
    return %arg0, %arg1, %c0_i32 : i32, i32, i32
  }
  func.func @transform_3(%arg0: i32, %arg1: i32) -> (i32, i32, i32, i32) {
    %c0_i32 = arith.constant 0 : i32
    %c0_i32_0 = arith.constant 0 : i32
    %c0_i32_1 = arith.constant 0 : i32
    return %arg0, %arg1, %c0_i32, %c0_i32_0 : i32, i32, i32, i32
  }
  func.func @transform_4(%arg0: i32, %arg1: i32) -> (i32, i32, i32, i32) {
    %c0_i32 = arith.constant 0 : i32
    %c0_i32_0 = arith.constant 0 : i32
    %c0_i32_1 = arith.constant 0 : i32
    return %arg0, %arg1, %c0_i32, %c0_i32_0 : i32, i32, i32, i32
  }
}

</mosaic_0001>

<llo_original>
// kernel: tpu_custom_call.1
$region0: #{tpu_custom_call.1}
  #allocation0 [shape = 'u32[]', space=smem, size = 0x4, offset = 0x4, fixed_abs, tag = 'smem constant byte address 0x4 - core index']
  #allocation1 [shape = 'u32[144,128]{1,0:T(1,128)}', space=vmem, size = 0x12000, scoped, tag = 'internal scratch']
  %s0 = inlined_call_operand.hbm [shape: f32[2,4,2,128], index: 0, kind: input, shape index: {}]
  %s1 = inlined_call_operand.hbm [shape: f32[2,4,2,128], index: 1, kind: input, shape index: {}]
  %s2 = inlined_call_operand.hbm [shape: f32[2,2,128], index: 2, kind: input, shape index: {}]
  %s3 = inlined_call_operand.hbm [shape: f32[2,1,1,128], index: 3, kind: output, shape index: {0}]
  %s4 = inlined_call_operand.hbm [shape: f32[2,1,1,128], index: 4, kind: output, shape index: {1}]
  %5 = xla_tuple %s3, %s4
  %s6 = sld [smem:[#allocation0]]
  $region65: #{tpu_custom_call.1} parent=0
    _
  %s8 = ssub.s32 1, %s6
  %s9 = scalar_select 0, %s8, %s6
  $region1: #{tpu_custom_call.1} parent=0
    #allocation2 [shape = 'u8[8192]{0}', space=vmem, size = 0x2000, scoped, tag = 'input window, operand 0']
    #allocation3 [shape = 's32[2]{0}', space=sflag, size = 0x8, scoped, tag = 'scoped memory for tpu_custom_call.1']
    #allocation4 [shape = 's32[2]{0}', space=sflag, size = 0x8, scoped, tag = 'scoped memory for tpu_custom_call.1']
    #allocation5 [shape = 'u8[8192]{0}', space=vmem, size = 0x2000, scoped, tag = 'input window, operand 1']
    #allocation6 [shape = 's32[2]{0}', space=sflag, size = 0x8, scoped, tag = 'scoped memory for tpu_custom_call.1']
    #allocation7 [shape = 'u8[2048]{0}', space=vmem, size = 0x800, scoped, tag = 'input window, operand 2']
    #allocation8 [shape = 'u8[1024]{0}', space=vmem, size = 0x400, scoped, tag = 'output window, operand 0']
    #allocation9 [shape = 'u8[1024]{0}', space=vmem, size = 0x400, scoped, tag = 'output window, operand 1']
    #allocation10 [shape = 's32[2]{0}', space=sflag, size = 0x8, scoped, tag = 'scoped memory for tpu_custom_call.1']
    %10 = vsyncpa [#allocation3], 0
    %s11 = scalar_lea.sflag [#allocation3], 1
    %12 = vsyncpa %s11, 0
    %13 = vsyncpa [#allocation6], 0
    %s14 = scalar_lea.sflag [#allocation6], 1
    %15 = vsyncpa %s14, 0
    %16 = vsyncpa [#allocation4], 0
    %s17 = scalar_lea.sflag [#allocation4], 1
    %18 = vsyncpa %s17, 0
    %19 = vsyncpa [#allocation10], 0
    %s20 = scalar_lea.sflag [#allocation10], 1
    %21 = vsyncpa %s20, 0
    loop: start=0, step=1, limit=4
    $region2: #{tpu_custom_call.1} parent=1 // loop_pre_header
      _
    $region3: #{tpu_custom_call.1} parent=1 // loop_header
      %s23 = sphi 0, %s27
      %p24 = scmp.ge.s32.totalorder %s23, 4
      %s30 = sphi 0, %s42
      %s31 = sphi 0, %s38
      %s32 = sphi 0, %s30
      %s33 = sphi 0, %s31
      %s34 = sphi 0, %s32
      %s35 = sphi 0, %s33
      %s47 = sphi 0, %s49
      %s50 = sphi 0, %s47
      %s51 = sphi 0, %s50
      %s67 = sphi 0, %s51
      %s75 = sphi 0, %s77
      %s78 = sphi 0, %s75
      %s79 = sphi 0, %s78
      %s95 = sphi 0, %s79
      %s103 = sphi 0, %s105
      %s106 = sphi 0, %s103
      %s107 = sphi 0, %s106
      %s123 = sphi 0, %s107
      %s131 = sphi 0, %s133
      %s134 = sphi 0, %s131
      %s135 = sphi 0, %s134
      %s151 = sphi 0, %s135
      %s159 = sphi 0, %s161
      %s162 = sphi 0, %s159
      %s163 = sphi 0, %s162
      %s179 = sphi 0, %s163
    $region4: #{tpu_custom_call.1} parent=1 // loop_header_branch
      %26 = sbr.rel (%p24) target = $region8
    $region5: #{tpu_custom_call.1} parent=1 // loop_body
      %s28 = ssub.s32 %s23, 1
      %s29 = ssub.s32 %s23, 2
      %s36 = sadd.s32 1, %s31
      %p37 = scmp.ge.s32.totalorder %s36, 1
      %s38 = scalar_select %p37, 0, %s36
      %s39 = sadd.s32 1, %s30
      %s40 = scalar_select %p37, %s39, %s30
      %p41 = scmp.ge.s32.totalorder %s40, 2
      %s42 = scalar_select %p41, 0, %s40
      %s43 = ssub.s32 %s30, %s42
      %s44 = ssub.s32 %s31, %s38
      %s45 = sor.u32 %s43, %s44
      %p46 = scmp.eq.s32.totalorder %s45, 0
      %s48 = sadd.s32 %s47, 1
      %s49 = scalar_select %p46, %s47, %s48
      %p52 = pneg %p46
      %p53 = scmp.eq.s32.totalorder %s23, 1
      %p54 = por %p52, %p53
      %p55 = scmp.ne.s32.totalorder %s47, %s50
      %p56 = scmp.eq.s32.totalorder %s23, 0
      %p57 = por %p55, %p56
      %p58 = scmp.ne.s32.totalorder %s47, %s50
      %p59 = scmp.eq.s32.totalorder %s28, 1
      %p60 = por %p58, %p59
      %p61 = scmp.ne.s32.totalorder %s50, %s51
      %p62 = scmp.eq.s32.totalorder %s28, 0
      %p63 = por %p61, %p62
      %p64 = scmp.ne.s32.totalorder %s50, %s51
      %p65 = scmp.eq.s32.totalorder %s29, 1
      %p66 = por %p64, %p65
      %p68 = scmp.ne.s32.totalorder %s51, %s67
      %p69 = scmp.eq.s32.totalorder %s29, 0
      %p70 = por %p68, %p69
      %s71 = ssub.s32 %s30, %s42
      %s72 = ssub.s32 %s31, %s38
      %s73 = sor.u32 %s71, %s72
      %p74 = scmp.eq.s32.totalorder %s73, 0
      %s76 = sadd.s32 %s75, 1
      %s77 = scalar_select %p74, %s75, %s76
      %p80 = pneg %p74
      %p81 = scmp.eq.s32.totalorder %s23, 1
      %p82 = por %p80, %p81
      %p83 = scmp.ne.s32.totalorder %s75, %s78
      %p84 = scmp.eq.s32.totalorder %s23, 0
      %p85 = por %p83, %p84
      %p86 = scmp.ne.s32.totalorder %s75, %s78
      %p87 = scmp.eq.s32.totalorder %s28, 1
      %p88 = por %p86, %p87
      %p89 = scmp.ne.s32.totalorder %s78, %s79
      %p90 = scmp.eq.s32.totalorder %s28, 0
      %p91 = por %p89, %p90
      %p92 = scmp.ne.s32.totalorder %s78, %s79
      %p93 = scmp.eq.s32.totalorder %s29, 1
      %p94 = por %p92, %p93
      %p96 = scmp.ne.s32.totalorder %s79, %s95
      %p97 = scmp.eq.s32.totalorder %s29, 0
      %p98 = por %p96, %p97
      %s99 = ssub.s32 %s30, %s42
      %s100 = ssub.s32 %s31, %s38
      %s101 = sor.u32 %s99, %s100
      %p102 = scmp.eq.s32.totalorder %s101, 0
      %s104 = sadd.s32 %s103, 1
      %s105 = scalar_select %p102, %s103, %s104
      %p108 = pneg %p102
      %p109 = scmp.eq.s32.totalorder %s23, 1
      %p110 = por %p108, %p109
      %p111 = scmp.ne.s32.totalorder %s103, %s106
      %p112 = scmp.eq.s32.totalorder %s23, 0
      %p113 = por %p111, %p112
      %p114 = scmp.ne.s32.totalorder %s103, %s106
      %p115 = scmp.eq.s32.totalorder %s28, 1
      %p116 = por %p114, %p115
      %p117 = scmp.ne.s32.totalorder %s106, %s107
      %p118 = scmp.eq.s32.totalorder %s28, 0
      %p119 = por %p117, %p118
      %p120 = scmp.ne.s32.totalorder %s106, %s107
      %p121 = scmp.eq.s32.totalorder %s29, 1
      %p122 = por %p120, %p121
      %p124 = scmp.ne.s32.totalorder %s107, %s123
      %p125 = scmp.eq.s32.totalorder %s29, 0
      %p126 = por %p124, %p125
      %s127 = ssub.s32 %s30, %s42
      %s128 = ssub.s32 %s31, %s38
      %s129 = sor.u32 %s127, %s128
      %p130 = scmp.eq.s32.totalorder %s129, 0
      %s132 = sadd.s32 %s131, 1
      %s133 = scalar_select %p130, %s131, %s132
      %p136 = pneg %p130
      %p137 = scmp.eq.s32.totalorder %s23, 1
      %p138 = por %p136, %p137
      %p139 = scmp.ne.s32.totalorder %s131, %s134
      %p140 = scmp.eq.s32.totalorder %s23, 0
      %p141 = por %p139, %p140
      %p142 = scmp.ne.s32.totalorder %s131, %s134
      %p143 = scmp.eq.s32.totalorder %s28, 1
      %p144 = por %p142, %p143
      %p145 = scmp.ne.s32.totalorder %s134, %s135
      %p146 = scmp.eq.s32.totalorder %s28, 0
      %p147 = por %p145, %p146
      %p148 = scmp.ne.s32.totalorder %s134, %s135
      %p149 = scmp.eq.s32.totalorder %s29, 1
      %p150 = por %p148, %p149
      %p152 = scmp.ne.s32.totalorder %s135, %s151
      %p153 = scmp.eq.s32.totalorder %s29, 0
      %p154 = por %p152, %p153
      %s155 = ssub.s32 %s30, %s42
      %s156 = ssub.s32 %s31, %s38
      %s157 = sor.u32 %s155, %s156
      %p158 = scmp.eq.s32.totalorder %s157, 0
      %s160 = sadd.s32 %s159, 1
      %s161 = scalar_select %p158, %s159, %s160
      %p164 = pneg %p158
      %p165 = scmp.eq.s32.totalorder %s23, 1
      %p166 = por %p164, %p165
      %p167 = scmp.ne.s32.totalorder %s159, %s162
      %p168 = scmp.eq.s32.totalorder %s23, 0
      %p169 = por %p167, %p168
      %p170 = scmp.ne.s32.totalorder %s159, %s162
      %p171 = scmp.eq.s32.totalorder %s28, 1
      %p172 = por %p170, %p171
      %p173 = scmp.ne.s32.totalorder %s162, %s163
      %p174 = scmp.eq.s32.totalorder %s28, 0
      %p175 = por %p173, %p174
      %p176 = scmp.ne.s32.totalorder %s162, %s163
      %p177 = scmp.eq.s32.totalorder %s29, 1
      %p178 = por %p176, %p177
      %p180 = scmp.ne.s32.totalorder %s163, %s179
      %p181 = scmp.eq.s32.totalorder %s29, 0
      %p182 = por %p180, %p181
      %p183 = scmp.le.s32.totalorder 1, %s23
      %p184 = scmp.lt.s32.totalorder %s23, 3
      %p185 = pnand %p183, %p184
      %p186 = pneg %p185
      // Predicated region
      $region9: #{tpu_custom_call.1} parent=5 // pred_check
        _
      $region10: #{tpu_custom_call.1} parent=5 // pred_check_branch
        %188 = sbr.rel (%p185) target = $region12
      $region11: #{tpu_custom_call.1} parent=5 // pred_region
        %s189 = ssub.s32 %s23, 1
      $region12: #{tpu_custom_call.1} parent=5 // pred_fallthru
        _
      %p190 = scmp.lt.s32.totalorder %s23, 2
      // Predicated region
      $region13: #{tpu_custom_call.1} parent=5 // pred_check
        %p191 = pneg %p190
      $region14: #{tpu_custom_call.1} parent=5 // pred_check_branch
        %193 = sbr.rel (%p191) target = $region16
      $region15: #{tpu_custom_call.1} parent=5 // pred_region
        // Predicated region
        $region17: #{tpu_custom_call.1} parent=15 // pred_check
          %p194 = pneg %p57
        $region18: #{tpu_custom_call.1} parent=15 // pred_check_branch
          %196 = sbr.rel (%p194) target = $region20
        $region19: #{tpu_custom_call.1} parent=15 // pred_region
          %s197 = sand.u32 %s47, 1
          %s198 = scalar_lea.sflag [#allocation3], %s197
          %s199 = sand.u32 %s47, 1
          %s200 = smul.addr %s199, 8
          %s201 = scalar_lea.vmem [#allocation2], %s200
          %s203 = ssub.s32 128, 128
          %204 = vsyncadd %s198, %s203
          %s205 = smul.addr %s30, 4
          %s206 = sadd.s32 %s31, %s205
          %s207 = smul.addr %s206, 32
          %s208 = scalar_lea.hbm %s0, %s207
          %s209 = sshll.u32 %s201, 4
          %s210 = int_to_ptr.vmem [resolvable:$true] %s209
          %215 = dma.hbm_to_vmem [thread:$0]  %s208, 128, %s210, %s198, 32, 32, 2
        $region20: #{tpu_custom_call.1} parent=15 // pred_fallthru
          _
        // Predicated region
        $region21: #{tpu_custom_call.1} parent=15 // pred_check
          %p216 = pneg %p85
        $region22: #{tpu_custom_call.1} parent=15 // pred_check_branch
          %218 = sbr.rel (%p216) target = $region24
        $region23: #{tpu_custom_call.1} parent=15 // pred_region
          %s219 = sand.u32 %s23, 1
          %s220 = scalar_lea.sflag [#allocation6], %s219
          %s221 = sand.u32 %s75, 1
          %s222 = smul.addr %s221, 8
          %s223 = scalar_lea.vmem [#allocation5], %s222
          %s225 = ssub.s32 128, 128
          %226 = vsyncadd %s220, %s225
          %s227 = smul.addr %s30, 4
          %s228 = sadd.s32 %s31, %s227
          %s229 = smul.addr %s228, 32
          %s230 = scalar_lea.hbm %s1, %s229
          %s231 = sshll.u32 %s223, 4
          %s232 = int_to_ptr.vmem [resolvable:$true] %s231
          %237 = dma.hbm_to_vmem [thread:$0]  %s230, 128, %s232, %s220, 32, 32, 2
        $region24: #{tpu_custom_call.1} parent=15 // pred_fallthru
          _
        // Predicated region
        $region25: #{tpu_custom_call.1} parent=15 // pred_check
          %p238 = pneg %p113
        $region26: #{tpu_custom_call.1} parent=15 // pred_check_branch
          %240 = sbr.rel (%p238) target = $region28
        $region27: #{tpu_custom_call.1} parent=15 // pred_region
          %s241 = sand.u32 %s23, 1
          %s242 = scalar_lea.sflag [#allocation6], %s241
          %s243 = sand.u32 %s103, 1
          %s244 = smul.addr %s243, 2
          %s245 = scalar_lea.vmem [#allocation7], %s244
          %s247 = ssub.s32 32, 32
          %248 = vsyncadd %s242, %s247
          %s249 = sadd.s32 %s31, %s30
          %s250 = smul.addr %s249, 32
          %s251 = scalar_lea.hbm %s2, %s250
          %s253 = sshll.u32 %s245, 4
          %s254 = int_to_ptr.vmem [resolvable:$true] %s253
          %256 = dma.hbm_to_vmem [thread:$0]  %s251, 32, %s254, %s242
        $region28: #{tpu_custom_call.1} parent=15 // pred_fallthru
          _
      $region16: #{tpu_custom_call.1} parent=5 // pred_fallthru
        _
      %p257 = scmp.le.s32.totalorder 1, %s23
      %p258 = scmp.lt.s32.totalorder %s23, 3
      %p259 = pnand %p257, %p258
      %p260 = pneg %p259
      // Predicated region
      $region29: #{tpu_custom_call.1} parent=5 // pred_check
        _
      $region30: #{tpu_custom_call.1} parent=5 // pred_check_branch
        %262 = sbr.rel (%p259) target = $region32
      $region31: #{tpu_custom_call.1} parent=5 // pred_region
        %s263 = ssub.s32 %s23, 1
        %s264 = sand.u32 %s50, 1
        %s265 = scalar_lea.sflag [#allocation3], %s264
        %s266 = sand.u32 %s50, 1
        %s267 = smul.addr %s266, 8
        %s268 = scalar_lea.vmem [#allocation2], %s267
        // Predicated region
        $region33: #{tpu_custom_call.1} parent=31 // pred_check
          %p269 = pneg %p63
        $region34: #{tpu_custom_call.1} parent=31 // pred_check_branch
          %271 = sbr.rel (%p269) target = $region36
        $region35: #{tpu_custom_call.1} parent=31 // pred_region
          %272 = dma.done %s265, 128
        $region36: #{tpu_custom_call.1} parent=31 // pred_fallthru
          _
        %s273 = sand.u32 %s28, 1
        %s274 = scalar_lea.sflag [#allocation6], %s273
        %s275 = sand.u32 %s78, 1
        %s276 = smul.addr %s275, 8
        %s277 = scalar_lea.vmem [#allocation5], %s276
        // Predicated region
        $region37: #{tpu_custom_call.1} parent=31 // pred_check
          %p278 = pneg %p91
        $region38: #{tpu_custom_call.1} parent=31 // pred_check_branch
          %280 = sbr.rel (%p278) target = $region40
        $region39: #{tpu_custom_call.1} parent=31 // pred_region
          %281 = dma.done %s274, 128
        $region40: #{tpu_custom_call.1} parent=31 // pred_fallthru
          _
        %s282 = sand.u32 %s28, 1
        %s283 = scalar_lea.sflag [#allocation6], %s282
        %s284 = sand.u32 %s106, 1
        %s285 = smul.addr %s284, 2
        %s286 = scalar_lea.vmem [#allocation7], %s285
        // Predicated region
        $region41: #{tpu_custom_call.1} parent=31 // pred_check
          %p287 = pneg %p119
        $region42: #{tpu_custom_call.1} parent=31 // pred_check_branch
          %289 = sbr.rel (%p287) target = $region44
        $region43: #{tpu_custom_call.1} parent=31 // pred_region
          %290 = dma.done %s283, 32
        $region44: #{tpu_custom_call.1} parent=31 // pred_fallthru
          _
        %s291 = sand.u32 %s50, 1
        %s292 = scalar_lea.sflag [#allocation3], %s291
        %s293 = sand.u32 %s50, 1
        %s294 = smul.addr %s293, 8
        %s295 = scalar_lea.vmem [#allocation2], %s294
        %p296 = pneg %p63
        %p297 = pneg %p60
        %s298 = sand.u32 %s28, 1
        %s299 = scalar_lea.sflag [#allocation6], %s298
        %s300 = sand.u32 %s78, 1
        %s301 = smul.addr %s300, 8
        %s302 = scalar_lea.vmem [#allocation5], %s301
        %p303 = pneg %p91
        %p304 = pneg %p88
        %s305 = sand.u32 %s28, 1
        %s306 = scalar_lea.sflag [#allocation6], %s305
        %s307 = sand.u32 %s106, 1
        %s308 = smul.addr %s307, 2
        %s309 = scalar_lea.vmem [#allocation7], %s308
        %p310 = pneg %p119
        %p311 = pneg %p116
        %p312 = pneg %p147
        %p313 = pneg %p144
        %s314 = sand.u32 %s134, 1
        %s315 = scalar_lea.sflag [#allocation4], %s314
        %s316 = sand.u32 %s134, 1
        %s317 = scalar_lea.vmem [#allocation8], %s316
        %p318 = pneg %p175
        %p319 = pneg %p172
        %s320 = sand.u32 %s162, 1
        %s321 = scalar_lea.sflag [#allocation10], %s320
        %s322 = sand.u32 %s162, 1
        %s323 = scalar_lea.vmem [#allocation9], %s322
        %v324 = vld [vmem:[%s277] sm:$0x3]
        %v325 = vld [vmem:[%s268] sm:$0x3]
        %vm326 = vweird.f32 %v324
        %vm327 = vmxor %vm326, 1
        %v328 = vsub.f32 %v324, %v325
        %v329 = vand.u32 2147483647, %v328
        %v330 = vmul.f32 %v324, %v324
        %s331 = scalar_lea.vmem %s277, 2 [#allocation5]
        %v332 = vld [vmem:[%s331] sm:$0x3]
        %s333 = scalar_lea.vmem %s268, 2 [#allocation2]
        %v334 = vld [vmem:[%s333] sm:$0x3]
        %v335 = vsub.f32 %v332, %v334
        %v336 = vand.u32 2147483647, %v335
        %v337 = vadd.f32 %v329, %v336
        %v338 = vmul.f32 %v332, %v332
        %v339 = vadd.f32 %v330, %v338
        %s340 = scalar_lea.vmem %s277, 4 [#allocation5]
        %v341 = vld [vmem:[%s340] sm:$0x3]
        %s342 = scalar_lea.vmem %s268, 4 [#allocation2]
        %v343 = vld [vmem:[%s342] sm:$0x3]
        %v344 = vsub.f32 %v341, %v343
        %v345 = vand.u32 2147483647, %v344
        %v346 = vadd.f32 %v337, %v345
        %v347 = vmul.f32 %v341, %v341
        %v348 = vadd.f32 %v339, %v347
        %s349 = scalar_lea.vmem %s277, 6 [#allocation5]
        %v350 = vld [vmem:[%s349] sm:$0x3]
        %s351 = scalar_lea.vmem %s268, 6 [#allocation2]
        %v352 = vld [vmem:[%s351] sm:$0x3]
        %v353 = vsub.f32 %v350, %v352
        %v354 = vand.u32 2147483647, %v353
        %v355 = vadd.f32 %v346, %v354
        %v356 = vmul.f32 %v350, %v350
        %v357 = vadd.f32 %v348, %v356
        %vm358 = vcmp.lt.f32.partialorder %v357, 1e+08
        %vm359 = vmand %vm327, %vm358
        %v360 = vld [vmem:[%s286] sm:$0x3]
        %v361 = vxor.u32 %v360, 2147483648
        %v362 = vmul.f32 %v361, 1.442695
        %v363 = vpow.pop %v362
        %v364 = vadd.f32 %v363, 1.0
        %v365 = vrcp.pop %v364
        %v366 = vmul.f32 1.0, %v365
        %v367 = vmul.f32 %v366, 3.75
        %v368 = vadd.f32 %v367, 0.25
        %v369 = vrcp.pop %v368
        %v370 = vmul.f32 %v355, %v369
        %v371 = vlog2.pop %v368
        %v372 = vmul.f32 %v371, 0.6931472
        %v373 = vadd.f32 %v370, %v372
        %v374 = vsel %vm359, %v373, 0.0
        %vm375 = vcmask 1041408
        %v376 = vsel %vm375, %v374, 0.0
        %v377 = vrot.slane %v376, 4
        %v378 = vadd.f32 %v376, %v377
        %v379 = vrot.slane %v378, 2
        %v380 = vadd.f32 %v378, %v379
        %v381 = vrot.slane %v380, 1
        %v382 = vadd.f32 %v380, %v381
        %383 = vst [vmem:[%s317] sm:$0x1] %v382
        %v384 = vsel %vm359, 1, 0
        %v385 = vcvt.s32.f32 %v384
        %v386 = vsel %vm375, %v385, 0.0
        %v387 = vrot.slane %v386, 4
        %v388 = vadd.f32 %v386, %v387
        %v389 = vrot.slane %v388, 2
        %v390 = vadd.f32 %v388, %v389
        %v391 = vrot.slane %v390, 1
        %v392 = vadd.f32 %v390, %v391
        %393 = vst [vmem:[%s323] sm:$0x1] %v392
        %s394 = sand.u32 %s134, 1
        %s395 = scalar_lea.sflag [#allocation4], %s394
        %s396 = sand.u32 %s134, 1
        %s397 = scalar_lea.vmem [#allocation8], %s396
        %s398 = sand.u32 %s162, 1
        %s399 = scalar_lea.sflag [#allocation10], %s398
        %s400 = sand.u32 %s162, 1
        %s401 = scalar_lea.vmem [#allocation9], %s400
        // Predicated region
        $region45: #{tpu_custom_call.1} parent=31 // pred_check
          %p402 = pneg %p144
        $region46: #{tpu_custom_call.1} parent=31 // pred_check_branch
          %404 = sbr.rel (%p402) target = $region48
        $region47: #{tpu_custom_call.1} parent=31 // pred_region
          %s406 = ssub.s32 16, 16
          %407 = vsyncadd %s395, %s406
          %s408 = sadd.s32 %s33, %s32
          %s409 = smul.addr %s408, 16
          %s410 = scalar_lea.hbm %s3, %s409
          %s412 = sshll.u32 %s397, 4
          %s413 = int_to_ptr.vmem [resolvable:$true] %s412
          %415 = dma.vmem_to_hbm [thread:$0]  %s413, 16, %s410, %s395
        $region48: #{tpu_custom_call.1} parent=31 // pred_fallthru
          _
        // Predicated region
        $region49: #{tpu_custom_call.1} parent=31 // pred_check
          %p416 = pneg %p172
        $region50: #{tpu_custom_call.1} parent=31 // pred_check_branch
          %418 = sbr.rel (%p416) target = $region52
        $region51: #{tpu_custom_call.1} parent=31 // pred_region
          %s420 = ssub.s32 16, 16
          %421 = vsyncadd %s399, %s420
          %s422 = sadd.s32 %s33, %s32
          %s423 = smul.addr %s422, 16
          %s424 = scalar_lea.hbm %s4, %s423
          %s426 = sshll.u32 %s401, 4
          %s427 = int_to_ptr.vmem [resolvable:$true] %s426
          %429 = dma.vmem_to_hbm [thread:$0]  %s427, 16, %s424, %s399
        $region52: #{tpu_custom_call.1} parent=31 // pred_fallthru
          _
      $region32: #{tpu_custom_call.1} parent=5 // pred_fallthru
        _
      %p430 = scmp.le.s32.totalorder 2, %s23
      // Predicated region
      $region53: #{tpu_custom_call.1} parent=5 // pred_check
        %p431 = pneg %p430
      $region54: #{tpu_custom_call.1} parent=5 // pred_check_branch
        %433 = sbr.rel (%p431) target = $region56
      $region55: #{tpu_custom_call.1} parent=5 // pred_region
        %s434 = ssub.s32 %s23, 2
        // Predicated region
        $region57: #{tpu_custom_call.1} parent=55 // pred_check
          %p435 = pneg %p150
        $region58: #{tpu_custom_call.1} parent=55 // pred_check_branch
          %437 = sbr.rel (%p435) target = $region60
        $region59: #{tpu_custom_call.1} parent=55 // pred_region
          %s438 = sand.u32 %s135, 1
          %s439 = scalar_lea.sflag [#allocation4], %s438
          %s440 = sand.u32 %s135, 1
          %s441 = scalar_lea.vmem [#allocation8], %s440
          %442 = dma.done %s439, 16
        $region60: #{tpu_custom_call.1} parent=55 // pred_fallthru
          _
        // Predicated region
        $region61: #{tpu_custom_call.1} parent=55 // pred_check
          %p443 = pneg %p178
        $region62: #{tpu_custom_call.1} parent=55 // pred_check_branch
          %445 = sbr.rel (%p443) target = $region64
        $region63: #{tpu_custom_call.1} parent=55 // pred_region
          %s446 = sand.u32 %s163, 1
          %s447 = scalar_lea.sflag [#allocation10], %s446
          %s448 = sand.u32 %s163, 1
          %s449 = scalar_lea.vmem [#allocation9], %s448
          %450 = dma.done %s447, 16
        $region64: #{tpu_custom_call.1} parent=55 // pred_fallthru
          _
      $region56: #{tpu_custom_call.1} parent=5 // pred_fallthru
        _
    $region6: #{tpu_custom_call.1} parent=1 // loop_footer
      %s27 = sadd.s32 1, %s23
    $region7: #{tpu_custom_call.1} parent=1 // loop_footer_branch
      %22 = sbr.rel target = $region3
    $region8: #{tpu_custom_call.1} parent=1 // loop_exit
      _
    %451 = vsyncpa [#allocation3], 1
    %s452 = scalar_lea.sflag [#allocation3], 1
    %453 = vsyncpa %s452, 1
    %454 = vsyncpa [#allocation6], 1
    %s455 = scalar_lea.sflag [#allocation6], 1
    %456 = vsyncpa %s455, 1
    %457 = vsyncpa [#allocation4], 1
    %s458 = scalar_lea.sflag [#allocation4], 1
    %459 = vsyncpa %s458, 1
    %460 = vsyncpa [#allocation10], 1
    %s461 = scalar_lea.sflag [#allocation10], 1
    %462 = vsyncpa %s461, 1

</llo_original>
